<compile_context>
chip_gen: v7x
topology: tpu7x:2x2x1
jax: 0.10.0
libtpu: 0.0.40
codegen_flags: <defaults>
</compile_context>

<pallas_src>
import functools

import jax
import jax.numpy as jnp
from jax import lax
from jax.experimental import pallas as pl
from jax.experimental.pallas import tpu as pltpu

LANES = 128


def _round_up(x, m):
    return ((x + m - 1) // m) * m


def _pow(x, e):
    """Integer exponents -> VPU multiplies (lax.integer_pow); else general pow."""
    ei = int(e)
    if float(e) == float(ei) and ei >= 0:
        return lax.integer_pow(x, ei)
    return x ** e


def _focal_loss_kernel(x_ref, t_ref, loss_ref, cnt_ref, *, alpha, beta,
                       block_rows, valid_rows, apply_mask):
    """One (block_rows, 128) tile -> accumulate into resident (8,128) outputs."""
    i = pl.program_id(1)

    @pl.when(i == 0)
    def _():
        loss_ref[...] = jnp.zeros_like(loss_ref)
        cnt_ref[...] = jnp.zeros_like(cnt_ref)

    x = x_ref[...].astype(jnp.float32)
    t = t_ref[...].astype(jnp.float32)

    is_pos = t == 1.0
    one_m_x = 1.0 - x
    one_m_t = 1.0 - t

    # focal_weight (detached in torch; forward value is identical)
    focal = jnp.where(is_pos, _pow(one_m_x, alpha),
                      _pow(one_m_t, beta) * _pow(x, alpha))

    # PyTorch binary_cross_entropy clamps the log terms at -100.
    log_x = jnp.maximum(jnp.log(x), -100.0)
    log_1mx = jnp.maximum(jnp.log(one_m_x), -100.0)
    bce = -(t * log_x + one_m_t * log_1mx) * focal
    pos = is_pos.astype(jnp.float32)

    if apply_mask:
        # Mask rows past the real data (ragged tail / fully out-of-range blocks).
        start = (pl.program_id(0) * pl.num_programs(1) + i) * block_rows
        row = start + lax.broadcasted_iota(jnp.int32, (block_rows, 1), 0)
        valid = row < valid_rows
        bce = jnp.where(valid, bce, 0.0)
        pos = jnp.where(valid, pos, 0.0)

    # Fold the tile to (8, 128) with pure vreg-wise adds (no cross-lane reduce
    # in the hot loop); accumulate into the resident output block.
    lanes = bce.shape[-1]
    loss_ref[...] += bce.reshape(block_rows // 8, 8, lanes).sum(axis=0)
    cnt_ref[...] += pos.reshape(block_rows // 8, 8, lanes).sum(axis=0)


def heatmap_focal_loss(inp, target, num_channels, alpha=2.0, beta=4.0,
                       block_rows=2048, num_parallel=2):
    """inp: (N, C, H, W) probabilities in (0,1); target: (N, H, W, C) in [0,1]."""
    N, C, H, W = inp.shape
    assert C == num_channels

    # Same element pairing as the PyTorch module (NHWC order), then flatten:
    # the loss is elementwise + global sum, so layout beyond pairing is free.
    x_flat = jnp.transpose(inp, (0, 2, 3, 1)).reshape(-1)
    t_flat = target.reshape(-1)
    total = x_flat.shape[0]

    # Pad (rarely) to a multiple of 128 so we can view as (K, 128).  Zero pad
    # contributes exactly zero loss and zero positive count (log is clamped
    # before the 0-weighted multiply, so no NaNs either).
    rem = (-total) % LANES
    if rem:
        x_flat = jnp.pad(x_flat, (0, rem))
        t_flat = jnp.pad(t_flat, (0, rem))
    K = (total + rem) // LANES  # rows of 128 lanes

    P = max(1, int(num_parallel))                      # 2 -> both TCs on v7x
    br = min(block_rows, _round_up(pl.cdiv(K, P), 8))  # shrink for tiny inputs
    br = max(8, (br // 8) * 8)                         # sublane multiple
    T = pl.cdiv(K, P * br)                             # tiles per parallel slice
    coverage = P * T * br
    apply_mask = coverage != K
    last_block = pl.cdiv(K, br) - 1

    x2 = x_flat.reshape(K, LANES)
    t2 = t_flat.reshape(K, LANES)

    if apply_mask:
        # Clamp so no block index points fully past the array; masked in-kernel.
        def in_idx(p, i):
            return (jnp.minimum(p * T + i, last_block), 0)
    else:
        def in_idx(p, i):
            return (p * T + i, 0)

    kernel = functools.partial(
        _focal_loss_kernel, alpha=alpha, beta=beta,
        block_rows=br, valid_rows=K, apply_mask=apply_mask)

    # Advisory scheduling hint: ~2 logs + ~12 VPU flops per element, 2 f32
    # streams in, tiny partial-sum blocks out.
    n_elem = K * LANES
    cost = pl.CostEstimate(
        flops=12 * n_elem,
        transcendentals=2 * n_elem,
        bytes_accessed=8 * n_elem + 2 * (P * 8 * LANES * 4),
    )

    loss_parts, cnt_parts = pl.pallas_call(
        kernel,
        out_shape=(
            jax.ShapeDtypeStruct((P * 8, LANES), jnp.float32),
            jax.ShapeDtypeStruct((P * 8, LANES), jnp.float32),
        ),
        grid_spec=pltpu.PrefetchScalarGridSpec(
            num_scalar_prefetch=0,
            grid=(P, T),
            in_specs=[
                pl.BlockSpec((br, LANES), in_idx),
                pl.BlockSpec((br, LANES), in_idx),
            ],
            out_specs=(
                pl.BlockSpec((8, LANES), lambda p, i: (p, 0)),
                pl.BlockSpec((8, LANES), lambda p, i: (p, 0)),
            ),
        ),
        compiler_params=pltpu.CompilerParams(
            dimension_semantics=("parallel", "arbitrary"),
        ),
        cost_estimate=cost,
    )(x2, t2)

    # Tiny final reductions + scalar divide in the wrapper.
    # normalizer = number of exact-1.0 targets (assumed > 0, as in the module).
    return jnp.sum(loss_parts) / jnp.sum(cnt_parts)


def _reference(inp, target, num_channels, alpha=2.0, beta=4.0):
    """Pure-JAX reference mirroring the PyTorch forward."""
    C = num_channels
    t = target.reshape(-1, C).astype(jnp.float32)
    p = jnp.transpose(inp, (0, 2, 3, 1)).reshape(-1, C).astype(jnp.float32)
    focal = jnp.where(t == 1.0, (1.0 - p) ** alpha,
                      ((1.0 - t) ** beta) * (p ** alpha))
    log_p = jnp.maximum(jnp.log(p), -100.0)
    log_1mp = jnp.maximum(jnp.log(1.0 - p), -100.0)
    bce = jnp.sum(-(t * log_p + (1.0 - t) * log_1mp) * focal)
    norm = jnp.sum((t == 1.0).astype(jnp.float32))
    return bce / norm


if __name__ == "__main__":
    N, C, H, W = 2, 4, 16, 16
    key = jax.random.PRNGKey(0)
    k1, k2, k3 = jax.random.split(key, 3)

    # Input heatmap predictions: probabilities in (0, 1).
    inp = jax.nn.sigmoid(jax.random.normal(k1, (N, C, H, W), dtype=jnp.float32))

    # Target heatmap (NHWC): values in [0, 1) with some exact 1.0 peaks.
    target = jax.random.uniform(k2, (N, H, W, C), dtype=jnp.float32) * 0.9
    peak_mask = jax.random.uniform(k3, (N, H, W, C)) < 0.02
    target = jnp.where(peak_mask, 1.0, target)
    # Guarantee at least one positive (normalizer > 0).
    target = target.at[0, 0, 0, 0].set(1.0)

    loss = heatmap_focal_loss(inp, target, num_channels=C, alpha=2.0, beta=4.0)
    loss = jax.block_until_ready(loss)

    ref = _reference(inp, target, num_channels=C)
    assert jnp.allclose(loss, ref, rtol=1e-5, atol=1e-5), (loss, ref)

    print("KERNEL_OK")
</pallas_src>

<mosaic_0001>
module attributes {stable_mosaic.version = 11 : i64} {
  func.func @_focal_loss_kernel(%arg0: i32, %arg1: i32, %arg2: memref<8x128xf32, #tpu.memory_space<vmem>>, %arg3: memref<8x128xf32, #tpu.memory_space<vmem>>, %arg4: memref<8x128xf32, #tpu.memory_space<vmem>>, %arg5: memref<8x128xf32, #tpu.memory_space<vmem>>) attributes {dimension_semantics = [#tpu.dimension_semantics<parallel>, #tpu.dimension_semantics<arbitrary>], iteration_bounds = array<i64: 2, 1>, scalar_prefetch = 0 : i64, scratch_operands = 0 : i64, tpu.core_type = #tpu.core_type<tc>, window_params = [{transform_indices = @transform_0, window_bounds = array<i64: 8, 128>}, {transform_indices = @transform_1, window_bounds = array<i64: 8, 128>}, {transform_indices = @transform_2, window_bounds = array<i64: 8, 128>}, {transform_indices = @transform_3, window_bounds = array<i64: 8, 128>}]} {
    %c0_i32 = arith.constant 0 : i32
    %0 = arith.cmpi eq, %arg1, %c0_i32 : i32
    %1 = arith.extui %0 : i1 to i32
    %c0_i32_0 = arith.constant 0 : i32
    %2 = arith.cmpi ne, %1, %c0_i32_0 : i32
    scf.if %2 {
      %cst_19 = arith.constant 0.000000e+00 : f32
      %41 = vector.broadcast %cst_19 : f32 to vector<8x128xf32>
      %c0_20 = arith.constant 0 : index
      %c0_21 = arith.constant 0 : index
      %42 = vector.load %arg4[%c0_20, %c0_21] : memref<8x128xf32, #tpu.memory_space<vmem>>, vector<8x128xf32>
      tpu.vector_store %arg4[%c0_20, %c0_21], %41 {strides = array<i32>} : memref<8x128xf32, #tpu.memory_space<vmem>>, vector<8x128xf32>,
      %cst_22 = arith.constant 0.000000e+00 : f32
      %43 = vector.broadcast %cst_22 : f32 to vector<8x128xf32>
      %c0_23 = arith.constant 0 : index
      %c0_24 = arith.constant 0 : index
      %44 = vector.load %arg5[%c0_23, %c0_24] : memref<8x128xf32, #tpu.memory_space<vmem>>, vector<8x128xf32>
      tpu.vector_store %arg5[%c0_23, %c0_24], %43 {strides = array<i32>} : memref<8x128xf32, #tpu.memory_space<vmem>>, vector<8x128xf32>,
    } else {
    }
    %c0 = arith.constant 0 : index
    %c0_1 = arith.constant 0 : index
    %3 = vector.load %arg2[%c0, %c0_1] : memref<8x128xf32, #tpu.memory_space<vmem>>, vector<8x128xf32>
    %c0_2 = arith.constant 0 : index
    %c0_3 = arith.constant 0 : index
    %4 = vector.load %arg3[%c0_2, %c0_3] : memref<8x128xf32, #tpu.memory_space<vmem>>, vector<8x128xf32>
    %cst = arith.constant 1.000000e+00 : f32
    %5 = vector.broadcast %cst : f32 to vector<8x128xf32>
    %6 = arith.cmpf oeq, %4, %5 : vector<8x128xf32>
    %cst_4 = arith.constant 1.000000e+00 : f32
    %7 = vector.broadcast %cst_4 : f32 to vector<8x128xf32>
    %8 = arith.subf %7, %3 : vector<8x128xf32>
    %cst_5 = arith.constant 1.000000e+00 : f32
    %9 = vector.broadcast %cst_5 : f32 to vector<8x128xf32>
    %10 = arith.subf %9, %4 : vector<8x128xf32>
    %11 = arith.mulf %8, %8 : vector<8x128xf32>
    %12 = arith.mulf %10, %10 : vector<8x128xf32>
    %13 = arith.mulf %12, %12 : vector<8x128xf32>
    %14 = arith.mulf %3, %3 : vector<8x128xf32>
    %15 = arith.mulf %13, %14 : vector<8x128xf32>
    %16 = arith.select %6, %11, %15 : vector<8x128xi1>, vector<8x128xf32>
    %17 = math.log %3 : vector<8x128xf32>
    %cst_6 = arith.constant -1.000000e+02 : f32
    %18 = vector.broadcast %cst_6 : f32 to vector<8x128xf32>
    %19 = arith.maximumf %17, %18 : vector<8x128xf32>
    %20 = math.log %8 : vector<8x128xf32>
    %cst_7 = arith.constant -1.000000e+02 : f32
    %21 = vector.broadcast %cst_7 : f32 to vector<8x128xf32>
    %22 = arith.maximumf %20, %21 : vector<8x128xf32>
    %23 = arith.mulf %4, %19 : vector<8x128xf32>
    %24 = arith.mulf %10, %22 : vector<8x128xf32>
    %25 = arith.addf %23, %24 : vector<8x128xf32>
    %cst_8 = arith.constant 0.000000e+00 : f32
    %26 = vector.broadcast %cst_8 : f32 to vector<8x128xf32>
    %27 = arith.subf %26, %25 : vector<8x128xf32>
    %28 = arith.mulf %27, %16 : vector<8x128xf32>
    %29 = arith.extui %6 : vector<8x128xi1> to vector<8x128xi32>
    %30 = arith.sitofp %29 : vector<8x128xi32> to vector<8x128xf32>
    %c0_9 = arith.constant 0 : index
    %c0_10 = arith.constant 0 : index
    %31 = vector.load %arg4[%c0_9, %c0_10] : memref<8x128xf32, #tpu.memory_space<vmem>>, vector<8x128xf32>
    %32 = vector.shape_cast %28 : vector<8x128xf32> to vector<1x8x128xf32>
    %cst_11 = arith.constant dense<0.000000e+00> : vector<8x128xf32>
    %33 = vector.multi_reduction <add>, %32, %cst_11 [0] : vector<1x8x128xf32> to vector<8x128xf32>
    %34 = arith.addf %31, %33 : vector<8x128xf32>
    %c0_12 = arith.constant 0 : index
    %c0_13 = arith.constant 0 : index
    %35 = vector.load %arg4[%c0_12, %c0_13] : memref<8x128xf32, #tpu.memory_space<vmem>>, vector<8x128xf32>
    tpu.vector_store %arg4[%c0_12, %c0_13], %34 {strides = array<i32>} : memref<8x128xf32, #tpu.memory_space<vmem>>, vector<8x128xf32>,
    %c0_14 = arith.constant 0 : index
    %c0_15 = arith.constant 0 : index
    %36 = vector.load %arg5[%c0_14, %c0_15] : memref<8x128xf32, #tpu.memory_space<vmem>>, vector<8x128xf32>
    %37 = vector.shape_cast %30 : vector<8x128xf32> to vector<1x8x128xf32>
    %cst_16 = arith.constant dense<0.000000e+00> : vector<8x128xf32>
    %38 = vector.multi_reduction <add>, %37, %cst_16 [0] : vector<1x8x128xf32> to vector<8x128xf32>
    %39 = arith.addf %36, %38 : vector<8x128xf32>
    %c0_17 = arith.constant 0 : index
    %c0_18 = arith.constant 0 : index
    %40 = vector.load %arg5[%c0_17, %c0_18] : memref<8x128xf32, #tpu.memory_space<vmem>>, vector<8x128xf32>
    tpu.vector_store %arg5[%c0_17, %c0_18], %39 {strides = array<i32>} : memref<8x128xf32, #tpu.memory_space<vmem>>, vector<8x128xf32>,
    return
  }
  func.func @transform_0(%arg0: i32, %arg1: i32) -> (i32, i32) {
    %c1_i32 = arith.constant 1 : i32
    %0 = arith.muli %arg0, %c1_i32 : i32
    %1 = arith.addi %0, %arg1 : i32
    %c0_i32 = arith.constant 0 : i32
    %c0_i32_0 = arith.constant 0 : i32
    return %1, %c0_i32 : i32, i32
  }
  func.func @transform_1(%arg0: i32, %arg1: i32) -> (i32, i32) {
    %c1_i32 = arith.constant 1 : i32
    %0 = arith.muli %arg0, %c1_i32 : i32
    %1 = arith.addi %0, %arg1 : i32
    %c0_i32 = arith.constant 0 : i32
    %c0_i32_0 = arith.constant 0 : i32
    return %1, %c0_i32 : i32, i32
  }
  func.func @transform_2(%arg0: i32, %arg1: i32) -> (i32, i32) {
    %c0_i32 = arith.constant 0 : i32
    %c0_i32_0 = arith.constant 0 : i32
    return %arg0, %c0_i32 : i32, i32
  }
  func.func @transform_3(%arg0: i32, %arg1: i32) -> (i32, i32) {
    %c0_i32 = arith.constant 0 : i32
    %c0_i32_0 = arith.constant 0 : i32
    return %arg0, %c0_i32 : i32, i32
  }
}

</mosaic_0001>

<llo_original>
// kernel: tpu_custom_call.1
$region0: #{tpu_custom_call.1}
  #allocation0 [shape = 'u32[]', space=smem, size = 0x4, offset = 0x4, fixed_abs, tag = 'smem constant byte address 0x4 - core index']
  #allocation1 [shape = 'u32[144,128]{1,0:T(1,128)}', space=vmem, size = 0x12000, scoped, tag = 'internal scratch']
  %s0 = inlined_call_operand.hbm [shape: f32[16,128], index: 0, kind: input, shape index: {}]
  %s1 = inlined_call_operand.hbm [shape: f32[16,128], index: 1, kind: input, shape index: {}]
  %s2 = inlined_call_operand.hbm [shape: f32[16,128], index: 2, kind: output, shape index: {0}]
  %s3 = inlined_call_operand.hbm [shape: f32[16,128], index: 3, kind: output, shape index: {1}]
  %4 = xla_tuple %s2, %s3
  %s5 = sld [smem:[#allocation0]]
  $region61: #{tpu_custom_call.1} parent=0
    _
  %s7 = ssub.s32 1, %s5
  %s8 = scalar_select 0, %s7, %s5
  $region1: #{tpu_custom_call.1} parent=0
    #allocation2 [shape = 'u8[8192]{0}', space=vmem, size = 0x2000, scoped, tag = 'input window, operand 0']
    #allocation3 [shape = 's32[2]{0}', space=sflag, size = 0x8, scoped, tag = 'scoped memory for tpu_custom_call.1']
    #allocation4 [shape = 's32[2]{0}', space=sflag, size = 0x8, scoped, tag = 'scoped memory for tpu_custom_call.1']
    #allocation5 [shape = 'u8[8192]{0}', space=vmem, size = 0x2000, scoped, tag = 'input window, operand 1']
    #allocation6 [shape = 's32[2]{0}', space=sflag, size = 0x8, scoped, tag = 'scoped memory for tpu_custom_call.1']
    #allocation7 [shape = 'u8[8192]{0}', space=vmem, size = 0x2000, scoped, tag = 'output window, operand 0']
    #allocation8 [shape = 'u8[8192]{0}', space=vmem, size = 0x2000, scoped, tag = 'output window, operand 1']
    #allocation9 [shape = 's32[2]{0}', space=sflag, size = 0x8, scoped, tag = 'scoped memory for tpu_custom_call.1']
    %9 = vsyncpa [#allocation3], 0
    %s10 = scalar_lea.sflag [#allocation3], 1
    %11 = vsyncpa %s10, 0
    %12 = vsyncpa [#allocation6], 0
    %s13 = scalar_lea.sflag [#allocation6], 1
    %14 = vsyncpa %s13, 0
    %15 = vsyncpa [#allocation4], 0
    %s16 = scalar_lea.sflag [#allocation4], 1
    %17 = vsyncpa %s16, 0
    %18 = vsyncpa [#allocation9], 0
    %s19 = scalar_lea.sflag [#allocation9], 1
    %20 = vsyncpa %s19, 0
    loop: start=0, step=1, limit=4
    $region2: #{tpu_custom_call.1} parent=1 // loop_pre_header
      _
    $region3: #{tpu_custom_call.1} parent=1 // loop_header
      %s22 = sphi 0, %s26
      %p23 = scmp.ge.s32.totalorder %s22, 4
      %s29 = sphi 0, %s41
      %s30 = sphi 0, %s37
      %s31 = sphi 0, %s29
      %s32 = sphi 0, %s30
      %s33 = sphi 0, %s31
      %s34 = sphi 0, %s32
      %s46 = sphi 0, %s48
      %s49 = sphi 0, %s46
      %s50 = sphi 0, %s49
      %s66 = sphi 0, %s50
      %s74 = sphi 0, %s76
      %s77 = sphi 0, %s74
      %s78 = sphi 0, %s77
      %s94 = sphi 0, %s78
      %s100 = sphi 0, %s102
      %s103 = sphi 0, %s100
      %s104 = sphi 0, %s103
      %s120 = sphi 0, %s104
      %s126 = sphi 0, %s128
      %s129 = sphi 0, %s126
      %s130 = sphi 0, %s129
      %s146 = sphi 0, %s130
    $region4: #{tpu_custom_call.1} parent=1 // loop_header_branch
      %25 = sbr.rel (%p23) target = $region8
    $region5: #{tpu_custom_call.1} parent=1 // loop_body
      %s27 = ssub.s32 %s22, 1
      %s28 = ssub.s32 %s22, 2
      %s35 = sadd.s32 1, %s30
      %p36 = scmp.ge.s32.totalorder %s35, 1
      %s37 = scalar_select %p36, 0, %s35
      %s38 = sadd.s32 1, %s29
      %s39 = scalar_select %p36, %s38, %s29
      %p40 = scmp.ge.s32.totalorder %s39, 2
      %s41 = scalar_select %p40, 0, %s39
      %s42 = sadd.s32 %s29, %s30
      %s43 = sadd.s32 %s41, %s37
      %s44 = ssub.s32 %s42, %s43
      %p45 = scmp.eq.s32.totalorder %s44, 0
      %s47 = sadd.s32 %s46, 1
      %s48 = scalar_select %p45, %s46, %s47
      %p51 = pneg %p45
      %p52 = scmp.eq.s32.totalorder %s22, 1
      %p53 = por %p51, %p52
      %p54 = scmp.ne.s32.totalorder %s46, %s49
      %p55 = scmp.eq.s32.totalorder %s22, 0
      %p56 = por %p54, %p55
      %p57 = scmp.ne.s32.totalorder %s46, %s49
      %p58 = scmp.eq.s32.totalorder %s27, 1
      %p59 = por %p57, %p58
      %p60 = scmp.ne.s32.totalorder %s49, %s50
      %p61 = scmp.eq.s32.totalorder %s27, 0
      %p62 = por %p60, %p61
      %p63 = scmp.ne.s32.totalorder %s49, %s50
      %p64 = scmp.eq.s32.totalorder %s28, 1
      %p65 = por %p63, %p64
      %p67 = scmp.ne.s32.totalorder %s50, %s66
      %p68 = scmp.eq.s32.totalorder %s28, 0
      %p69 = por %p67, %p68
      %s70 = sadd.s32 %s29, %s30
      %s71 = sadd.s32 %s41, %s37
      %s72 = ssub.s32 %s70, %s71
      %p73 = scmp.eq.s32.totalorder %s72, 0
      %s75 = sadd.s32 %s74, 1
      %s76 = scalar_select %p73, %s74, %s75
      %p79 = pneg %p73
      %p80 = scmp.eq.s32.totalorder %s22, 1
      %p81 = por %p79, %p80
      %p82 = scmp.ne.s32.totalorder %s74, %s77
      %p83 = scmp.eq.s32.totalorder %s22, 0
      %p84 = por %p82, %p83
      %p85 = scmp.ne.s32.totalorder %s74, %s77
      %p86 = scmp.eq.s32.totalorder %s27, 1
      %p87 = por %p85, %p86
      %p88 = scmp.ne.s32.totalorder %s77, %s78
      %p89 = scmp.eq.s32.totalorder %s27, 0
      %p90 = por %p88, %p89
      %p91 = scmp.ne.s32.totalorder %s77, %s78
      %p92 = scmp.eq.s32.totalorder %s28, 1
      %p93 = por %p91, %p92
      %p95 = scmp.ne.s32.totalorder %s78, %s94
      %p96 = scmp.eq.s32.totalorder %s28, 0
      %p97 = por %p95, %p96
      %s98 = ssub.s32 %s29, %s41
      %p99 = scmp.eq.s32.totalorder %s98, 0
      %s101 = sadd.s32 %s100, 1
      %s102 = scalar_select %p99, %s100, %s101
      %p105 = pneg %p99
      %p106 = scmp.eq.s32.totalorder %s22, 1
      %p107 = por %p105, %p106
      %p108 = scmp.ne.s32.totalorder %s100, %s103
      %p109 = scmp.eq.s32.totalorder %s22, 0
      %p110 = por %p108, %p109
      %p111 = scmp.ne.s32.totalorder %s100, %s103
      %p112 = scmp.eq.s32.totalorder %s27, 1
      %p113 = por %p111, %p112
      %p114 = scmp.ne.s32.totalorder %s103, %s104
      %p115 = scmp.eq.s32.totalorder %s27, 0
      %p116 = por %p114, %p115
      %p117 = scmp.ne.s32.totalorder %s103, %s104
      %p118 = scmp.eq.s32.totalorder %s28, 1
      %p119 = por %p117, %p118
      %p121 = scmp.ne.s32.totalorder %s104, %s120
      %p122 = scmp.eq.s32.totalorder %s28, 0
      %p123 = por %p121, %p122
      %s124 = ssub.s32 %s29, %s41
      %p125 = scmp.eq.s32.totalorder %s124, 0
      %s127 = sadd.s32 %s126, 1
      %s128 = scalar_select %p125, %s126, %s127
      %p131 = pneg %p125
      %p132 = scmp.eq.s32.totalorder %s22, 1
      %p133 = por %p131, %p132
      %p134 = scmp.ne.s32.totalorder %s126, %s129
      %p135 = scmp.eq.s32.totalorder %s22, 0
      %p136 = por %p134, %p135
      %p137 = scmp.ne.s32.totalorder %s126, %s129
      %p138 = scmp.eq.s32.totalorder %s27, 1
      %p139 = por %p137, %p138
      %p140 = scmp.ne.s32.totalorder %s129, %s130
      %p141 = scmp.eq.s32.totalorder %s27, 0
      %p142 = por %p140, %p141
      %p143 = scmp.ne.s32.totalorder %s129, %s130
      %p144 = scmp.eq.s32.totalorder %s28, 1
      %p145 = por %p143, %p144
      %p147 = scmp.ne.s32.totalorder %s130, %s146
      %p148 = scmp.eq.s32.totalorder %s28, 0
      %p149 = por %p147, %p148
      %p150 = scmp.le.s32.totalorder 1, %s22
      %p151 = scmp.lt.s32.totalorder %s22, 3
      %p152 = pnand %p150, %p151
      %p153 = pneg %p152
      // Predicated region
      $region9: #{tpu_custom_call.1} parent=5 // pred_check
        _
      $region10: #{tpu_custom_call.1} parent=5 // pred_check_branch
        %155 = sbr.rel (%p152) target = $region12
      $region11: #{tpu_custom_call.1} parent=5 // pred_region
        %s156 = ssub.s32 %s22, 1
      $region12: #{tpu_custom_call.1} parent=5 // pred_fallthru
        _
      %p157 = scmp.lt.s32.totalorder %s22, 2
      // Predicated region
      $region13: #{tpu_custom_call.1} parent=5 // pred_check
        %p158 = pneg %p157
      $region14: #{tpu_custom_call.1} parent=5 // pred_check_branch
        %160 = sbr.rel (%p158) target = $region16
      $region15: #{tpu_custom_call.1} parent=5 // pred_region
        // Predicated region
        $region17: #{tpu_custom_call.1} parent=15 // pred_check
          %p161 = pneg %p56
        $region18: #{tpu_custom_call.1} parent=15 // pred_check_branch
          %163 = sbr.rel (%p161) target = $region20
        $region19: #{tpu_custom_call.1} parent=15 // pred_region
          %s164 = sand.u32 %s46, 1
          %s165 = scalar_lea.sflag [#allocation3], %s164
          %s166 = sand.u32 %s46, 1
          %s167 = smul.addr %s166, 8
          %s168 = scalar_lea.vmem [#allocation2], %s167
          %s169 = sadd.s32 %s29, %s30
          %s171 = ssub.s32 128, 128
          %172 = vsyncadd %s165, %s171
          %s173 = smul.addr %s169, 128
          %s174 = scalar_lea.hbm %s0, %s173
          %s176 = sshll.u32 %s168, 4
          %s177 = int_to_ptr.vmem [resolvable:$true] %s176
          %179 = dma.hbm_to_vmem [thread:$0]  %s174, 128, %s177, %s165
        $region20: #{tpu_custom_call.1} parent=15 // pred_fallthru
          _
        // Predicated region
        $region21: #{tpu_custom_call.1} parent=15 // pred_check
          %p180 = pneg %p84
        $region22: #{tpu_custom_call.1} parent=15 // pred_check_branch
          %182 = sbr.rel (%p180) target = $region24
        $region23: #{tpu_custom_call.1} parent=15 // pred_region
          %s183 = sand.u32 %s74, 1
          %s184 = scalar_lea.sflag [#allocation6], %s183
          %s185 = sand.u32 %s74, 1
          %s186 = smul.addr %s185, 8
          %s187 = scalar_lea.vmem [#allocation5], %s186
          %s188 = sadd.s32 %s29, %s30
          %s190 = ssub.s32 128, 128
          %191 = vsyncadd %s184, %s190
          %s192 = smul.addr %s188, 128
          %s193 = scalar_lea.hbm %s1, %s192
          %s195 = sshll.u32 %s187, 4
          %s196 = int_to_ptr.vmem [resolvable:$true] %s195
          %198 = dma.hbm_to_vmem [thread:$0]  %s193, 128, %s196, %s184
        $region24: #{tpu_custom_call.1} parent=15 // pred_fallthru
          _
      $region16: #{tpu_custom_call.1} parent=5 // pred_fallthru
        _
      %p199 = scmp.le.s32.totalorder 1, %s22
      %p200 = scmp.lt.s32.totalorder %s22, 3
      %p201 = pnand %p199, %p200
      %p202 = pneg %p201
      // Predicated region
      $region25: #{tpu_custom_call.1} parent=5 // pred_check
        _
      $region26: #{tpu_custom_call.1} parent=5 // pred_check_branch
        %204 = sbr.rel (%p201) target = $region28
      $region27: #{tpu_custom_call.1} parent=5 // pred_region
        %s205 = ssub.s32 %s22, 1
        %s206 = sand.u32 %s49, 1
        %s207 = scalar_lea.sflag [#allocation3], %s206
        %s208 = sand.u32 %s49, 1
        %s209 = smul.addr %s208, 8
        %s210 = scalar_lea.vmem [#allocation2], %s209
        // Predicated region
        $region29: #{tpu_custom_call.1} parent=27 // pred_check
          %p211 = pneg %p62
        $region30: #{tpu_custom_call.1} parent=27 // pred_check_branch
          %213 = sbr.rel (%p211) target = $region32
        $region31: #{tpu_custom_call.1} parent=27 // pred_region
          %214 = dma.done %s207, 128
        $region32: #{tpu_custom_call.1} parent=27 // pred_fallthru
          _
        %s215 = sand.u32 %s77, 1
        %s216 = scalar_lea.sflag [#allocation6], %s215
        %s217 = sand.u32 %s77, 1
        %s218 = smul.addr %s217, 8
        %s219 = scalar_lea.vmem [#allocation5], %s218
        // Predicated region
        $region33: #{tpu_custom_call.1} parent=27 // pred_check
          %p220 = pneg %p90
        $region34: #{tpu_custom_call.1} parent=27 // pred_check_branch
          %222 = sbr.rel (%p220) target = $region36
        $region35: #{tpu_custom_call.1} parent=27 // pred_region
          %223 = dma.done %s216, 128
        $region36: #{tpu_custom_call.1} parent=27 // pred_fallthru
          _
        %s224 = sand.u32 %s49, 1
        %s225 = scalar_lea.sflag [#allocation3], %s224
        %s226 = sand.u32 %s49, 1
        %s227 = smul.addr %s226, 8
        %s228 = scalar_lea.vmem [#allocation2], %s227
        %p229 = pneg %p62
        %p230 = pneg %p59
        %s231 = sand.u32 %s77, 1
        %s232 = scalar_lea.sflag [#allocation6], %s231
        %s233 = sand.u32 %s77, 1
        %s234 = smul.addr %s233, 8
        %s235 = scalar_lea.vmem [#allocation5], %s234
        %p236 = pneg %p90
        %p237 = pneg %p87
        %p238 = pneg %p116
        %p239 = pneg %p113
        %s240 = sand.u32 %s103, 1
        %s241 = scalar_lea.sflag [#allocation4], %s240
        %s242 = sand.u32 %s103, 1
        %s243 = smul.addr %s242, 8
        %s244 = scalar_lea.vmem [#allocation7], %s243
        %p245 = pneg %p142
        %p246 = pneg %p139
        %s247 = sand.u32 %s129, 1
        %s248 = scalar_lea.sflag [#allocation9], %s247
        %s249 = sand.u32 %s129, 1
        %s250 = smul.addr %s249, 8
        %s251 = scalar_lea.vmem [#allocation8], %s250
        %s252 = sadd.s32 %s31, %s32
        %s253 = sadd.s32 %s31, %s32
        %p254 = scmp.eq.s32.totalorder %s32, 0
        // Predicated region
        $region37: #{tpu_custom_call.1} parent=27 // pred_check
          %p255 = pneg %p254
        $region38: #{tpu_custom_call.1} parent=27 // pred_check_branch
          %257 = sbr.rel (%p255) target = $region40
        $region39: #{tpu_custom_call.1} parent=27 // pred_region
          %258 = vst [vmem:[%s244] sm:$0xff] 0.0
          %259 = vst [vmem:[%s251] sm:$0xff] 0.0
        $region40: #{tpu_custom_call.1} parent=27 // pred_fallthru
          _
        %v260 = vld [vmem:[%s210] sm:$0xff]
        %v261 = vld [vmem:[%s219] sm:$0xff]
        %vm262 = vcmp.eq.f32.partialorder %v261, 1.0
        %v263 = vsub.f32 1.0, %v260
        %v264 = vsub.f32 1.0, %v261
        %v265 = vmul.f32 %v263, %v263
        %v266 = vmul.f32 %v264, %v264
        %v267 = vmul.f32 %v266, %v266
        %v268 = vmul.f32 %v260, %v260
        %v269 = vmul.f32 %v267, %v268
        %v270 = vsel %vm262, %v265, %v269
        %v271 = vlog2.pop %v260
        %v272 = vmul.f32 %v271, 0.6931472
        %v273 = vmax.f32 %v272, -100.0
        %v274 = vlog2.pop %v263
        %v275 = vmul.f32 %v274, 0.6931472
        %v276 = vmax.f32 %v275, -100.0
        %v277 = vmul.f32 %v261, %v273
        %v278 = vmul.f32 %v264, %v276
        %v279 = vadd.f32 %v277, %v278
        %v280 = vsub.f32 0.0, %v279
        %v281 = vmul.f32 %v280, %v270
        %v282 = vsel %vm262, 1, 0
        %v283 = vcvt.s32.f32 %v282
        %v284 = vld [vmem:[%s244] sm:$0xff]
        %v285 = vadd.f32 %v281, 0.0
        %v286 = vadd.f32 %v284, %v285
        %287 = vst [vmem:[%s244] sm:$0xff] %v286
        %v288 = vld [vmem:[%s251] sm:$0xff]
        %v289 = vadd.f32 %v283, 0.0
        %v290 = vadd.f32 %v288, %v289
        %291 = vst [vmem:[%s251] sm:$0xff] %v290
        %s292 = sand.u32 %s103, 1
        %s293 = scalar_lea.sflag [#allocation4], %s292
        %s294 = sand.u32 %s103, 1
        %s295 = smul.addr %s294, 8
        %s296 = scalar_lea.vmem [#allocation7], %s295
        %s297 = sand.u32 %s129, 1
        %s298 = scalar_lea.sflag [#allocation9], %s297
        %s299 = sand.u32 %s129, 1
        %s300 = smul.addr %s299, 8
        %s301 = scalar_lea.vmem [#allocation8], %s300
        // Predicated region
        $region41: #{tpu_custom_call.1} parent=27 // pred_check
          %p302 = pneg %p113
        $region42: #{tpu_custom_call.1} parent=27 // pred_check_branch
          %304 = sbr.rel (%p302) target = $region44
        $region43: #{tpu_custom_call.1} parent=27 // pred_region
          %s306 = ssub.s32 128, 128
          %307 = vsyncadd %s293, %s306
          %s308 = smul.addr %s31, 128
          %s309 = scalar_lea.hbm %s2, %s308
          %s311 = sshll.u32 %s296, 4
          %s312 = int_to_ptr.vmem [resolvable:$true] %s311
          %314 = dma.vmem_to_hbm [thread:$0]  %s312, 128, %s309, %s293
        $region44: #{tpu_custom_call.1} parent=27 // pred_fallthru
          _
        // Predicated region
        $region45: #{tpu_custom_call.1} parent=27 // pred_check
          %p315 = pneg %p139
        $region46: #{tpu_custom_call.1} parent=27 // pred_check_branch
          %317 = sbr.rel (%p315) target = $region48
        $region47: #{tpu_custom_call.1} parent=27 // pred_region
          %s319 = ssub.s32 128, 128
          %320 = vsyncadd %s298, %s319
          %s321 = smul.addr %s31, 128
          %s322 = scalar_lea.hbm %s3, %s321
          %s324 = sshll.u32 %s301, 4
          %s325 = int_to_ptr.vmem [resolvable:$true] %s324
          %327 = dma.vmem_to_hbm [thread:$0]  %s325, 128, %s322, %s298
        $region48: #{tpu_custom_call.1} parent=27 // pred_fallthru
          _
      $region28: #{tpu_custom_call.1} parent=5 // pred_fallthru
        _
      %p328 = scmp.le.s32.totalorder 2, %s22
      // Predicated region
      $region49: #{tpu_custom_call.1} parent=5 // pred_check
        %p329 = pneg %p328
      $region50: #{tpu_custom_call.1} parent=5 // pred_check_branch
        %331 = sbr.rel (%p329) target = $region52
      $region51: #{tpu_custom_call.1} parent=5 // pred_region
        %s332 = ssub.s32 %s22, 2
        // Predicated region
        $region53: #{tpu_custom_call.1} parent=51 // pred_check
          %p333 = pneg %p119
        $region54: #{tpu_custom_call.1} parent=51 // pred_check_branch
          %335 = sbr.rel (%p333) target = $region56
        $region55: #{tpu_custom_call.1} parent=51 // pred_region
          %s336 = sand.u32 %s104, 1
          %s337 = scalar_lea.sflag [#allocation4], %s336
          %s338 = sand.u32 %s104, 1
          %s339 = smul.addr %s338, 8
          %s340 = scalar_lea.vmem [#allocation7], %s339
          %341 = dma.done %s337, 128
        $region56: #{tpu_custom_call.1} parent=51 // pred_fallthru
          _
        // Predicated region
        $region57: #{tpu_custom_call.1} parent=51 // pred_check
          %p342 = pneg %p145
        $region58: #{tpu_custom_call.1} parent=51 // pred_check_branch
          %344 = sbr.rel (%p342) target = $region60
        $region59: #{tpu_custom_call.1} parent=51 // pred_region
          %s345 = sand.u32 %s130, 1
          %s346 = scalar_lea.sflag [#allocation9], %s345
          %s347 = sand.u32 %s130, 1
          %s348 = smul.addr %s347, 8
          %s349 = scalar_lea.vmem [#allocation8], %s348
          %350 = dma.done %s346, 128
        $region60: #{tpu_custom_call.1} parent=51 // pred_fallthru
          _
      $region52: #{tpu_custom_call.1} parent=5 // pred_fallthru
        _
    $region6: #{tpu_custom_call.1} parent=1 // loop_footer
      %s26 = sadd.s32 1, %s22
    $region7: #{tpu_custom_call.1} parent=1 // loop_footer_branch
      %21 = sbr.rel target = $region3
    $region8: #{tpu_custom_call.1} parent=1 // loop_exit
      _
    %351 = vsyncpa [#allocation3], 1
    %s352 = scalar_lea.sflag [#allocation3], 1
    %353 = vsyncpa %s352, 1
    %354 = vsyncpa [#allocation6], 1
    %s355 = scalar_lea.sflag [#allocation6], 1
    %356 = vsyncpa %s355, 1
    %357 = vsyncpa [#allocation4], 1
    %s358 = scalar_lea.sflag [#allocation4], 1
    %359 = vsyncpa %s358, 1
    %360 = vsyncpa [#allocation9], 1
    %s361 = scalar_lea.sflag [#allocation9], 1
    %362 = vsyncpa %s361, 1

</llo_original>
